<compile_context>
chip_gen: v7x
topology: tpu7x:2x2x1
jax: 0.10.0
libtpu: 0.0.40
codegen_flags: <defaults>
</compile_context>

<pallas_src>
from functools import partial

import numpy as np
import jax
import jax.numpy as jnp
from jax import lax
from jax.experimental import pallas as pl
from jax.experimental.pallas import tpu as pltpu


def _round_up(x, m):
    return (x + m - 1) // m * m


# ----------------------------------------------------------------------------
# Fused Pallas kernel: conv (single banded matmul, BN folded) + ReLU + pool + FC
# ----------------------------------------------------------------------------
def _fused_backbone_pallas(rows2d, band2d, bias_row, head, obias, *, H, nb):
    # rows2d   : (n_pad*H, kfull)  bf16  padded NHWC rows; kh taps concatenated on lanes
    # band2d   : (kfull, wcp)      bf16  banded conv weights (BN scale pre-folded)
    # bias_row : (1, wcp)          f32   per-output-column bias (BN + conv bias folded)
    # head     : (wcp, 128)        bf16  [pool*inv_hw | pool*inv_hw @ fc_w^T] (lane-padded)
    # obias    : (1, 128)          f32   fc bias placed on lanes [cout : cout+nc)
    total_rows, kfull = rows2d.shape
    wcp = band2d.shape[1]
    out_lanes = head.shape[1]
    n_pad = total_rows // H
    n_blocks = n_pad // nb

    def kernel(x_ref, w_ref, bias_ref, head_ref, obias_ref, out_ref):
        # conv for nb images at once: one tall K=kfull MXU matmul.
        acc = jnp.dot(x_ref[...], w_ref[...],
                      preferred_element_type=jnp.float32)            # (nb*H, wcp) f32
        feat = jnp.maximum(acc + bias_ref[...], 0.0)                  # bias + ReLU (f32)
        # per-image spatial row-sum (f32, on-chip), groups of H consecutive rows
        rowsum = jnp.sum(feat.reshape(nb, H, wcp), axis=1)            # (nb, wcp)
        # merged pool + classifier matmul -> one lane-dense 128-wide output block
        out = jnp.dot(rowsum.astype(jnp.bfloat16), head_ref[...],
                      preferred_element_type=jnp.float32) + obias_ref[...]
        out_ref[0] = out                                              # (nb, 128) unmasked store

    flops = 2 * total_rows * kfull * wcp + 2 * n_pad * wcp * out_lanes
    bytes_accessed = (rows2d.size * 2 + band2d.size * 2 + head.size * 2
                      + bias_row.size * 4 + obias.size * 4 + n_pad * out_lanes * 4)

    out3 = pl.pallas_call(
        kernel,
        out_shape=jax.ShapeDtypeStruct((n_blocks, nb, out_lanes), jnp.float32),
        grid_spec=pltpu.PrefetchScalarGridSpec(
            num_scalar_prefetch=0,
            grid=(n_blocks,),
            in_specs=[
                pl.BlockSpec((nb * H, kfull), lambda i: (i, 0)),
                pl.BlockSpec((kfull, wcp), lambda i: (0, 0)),
                pl.BlockSpec((1, wcp), lambda i: (0, 0)),
                pl.BlockSpec((wcp, out_lanes), lambda i: (0, 0)),
                pl.BlockSpec((1, out_lanes), lambda i: (0, 0)),
            ],
            out_specs=pl.BlockSpec((1, nb, out_lanes), lambda i: (i, 0, 0)),
        ),
        compiler_params=pltpu.CompilerParams(
            dimension_semantics=("parallel",),      # image-blocks shard over v7x's 2 TCs
            vmem_limit_bytes=32 * 1024 * 1024,
        ),
        cost_estimate=pl.CostEstimate(flops=int(flops), transcendentals=0,
                                      bytes_accessed=int(bytes_accessed)),
    )(rows2d, band2d, bias_row, head, obias)
    return out3.reshape(n_pad, out_lanes)


@partial(jax.jit, static_argnames=("k", "H", "W", "kpad", "nb"))
def _backbone_forward(x_nchw, band2d, bias_row, head, obias, *, k, H, W, kpad, nb):
    N, C, _, _ = x_nchw.shape
    pad = k // 2
    Wp = W + 2 * pad
    # NCHW (PyTorch) -> padded NHWC rows; the kh taps become pre-shifted copies
    # concatenated on the lane axis so the kernel does a single K=k*kpad matmul.
    x_nhwc = jnp.transpose(x_nchw, (0, 2, 3, 1))
    xp = jnp.pad(x_nhwc, ((0, 0), (pad, pad), (pad, pad), (0, 0)))
    taps = []
    for dh in range(k):                                               # static unroll
        t = xp[:, dh:dh + H, :, :].reshape(N, H, Wp * C)
        t = jnp.pad(t, ((0, 0), (0, 0), (0, kpad - Wp * C)))
        taps.append(t)
    rows = jnp.concatenate(taps, axis=-1)                             # (N, H, k*kpad)
    n_pad = _round_up(N, nb)
    if n_pad != N:
        rows = jnp.pad(rows, ((0, n_pad - N), (0, 0), (0, 0)))
    rows2d = rows.reshape(n_pad * H, k * kpad).astype(jnp.bfloat16)   # bf16 MXU operand
    out = _fused_backbone_pallas(rows2d, band2d, bias_row, head, obias, H=H, nb=nb)
    return out[:N]                                                    # (N, 128) lane-dense slab


class BackBonePallas:
    """Synthetic ResNet-style multigrain BackBone.

    features   : Conv2d(cin, cout, 3, stride=1, padding=1) + BatchNorm (inference) + ReLU
    pool       : global average pool
    classifier : Linear(cout, num_classes)
    pre_classifier / whitening : None (ResNet branch of BackBone)

    forward(x[NCHW]) -> (embedding (N, cout), classifier_output (N, num_classes))
    """

    def __init__(self, cin=4, cout=32, k=3, num_classes=16, feat_hw=(16, 16), eps=1e-5):
        self.cin, self.cout, self.k = cin, cout, k
        self.num_classes, self.eps = num_classes, eps
        self.H, self.W = feat_hw
        assert self.H % 8 == 0, "H must be sublane-tile aligned for the batched layout"
        keys = jax.random.split(jax.random.PRNGKey(42), 8)

        # PyTorch-layout parameters (also used by the pure-JAX reference check).
        self.conv_w = 0.1 * jax.random.normal(keys[0], (cout, cin, k, k), jnp.float32)
        self.conv_b = 0.01 * jax.random.normal(keys[1], (cout,), jnp.float32)
        self.bn_gamma = 1.0 + 0.1 * jax.random.normal(keys[2], (cout,), jnp.float32)
        self.bn_beta = 0.1 * jax.random.normal(keys[3], (cout,), jnp.float32)
        self.bn_mean = 0.05 * jax.random.normal(keys[4], (cout,), jnp.float32)
        self.bn_var = jnp.abs(1.0 + 0.1 * jax.random.normal(keys[5], (cout,), jnp.float32))
        self.fc_w = 0.1 * jax.random.normal(keys[6], (num_classes, cout), jnp.float32)
        self.fc_b = 0.01 * jax.random.normal(keys[7], (num_classes,), jnp.float32)

        # Fold BN (+ conv bias) into scale/bias; fold scale directly into the weights.
        scale = self.bn_gamma / jnp.sqrt(self.bn_var + eps)               # (cout,)
        bias = self.bn_beta + (self.conv_b - self.bn_mean) * scale        # (cout,)

        pad = k // 2
        H, W = self.H, self.W
        Wp = W + 2 * pad
        self.kpad = _round_up(Wp * cin, 128)       # per-tap contraction width, 128-aligned
        self.wcp = _round_up(W * cout, 128)        # lane-dense conv output width

        # Banded weight with kh taps stacked on the contraction dim:
        #   band[dh*kpad + wp*cin+ci, w*cout+co] = W_hwio[dh, wp-w, ci, co] * bn_scale
        w_hwio = np.asarray(
            jnp.transpose(self.conv_w, (2, 3, 1, 0)) * scale[None, None, None, :],
            dtype=np.float32)                                             # (k,k,cin,cout)
        band = np.zeros((k, self.kpad, self.wcp), np.float32)
        for dw in range(k):
            for w in range(W):
                wp = w + dw
                band[:, wp * cin:(wp + 1) * cin, w * cout:(w + 1) * cout] = w_hwio[:, dw, :, :]
        self.band2d = jnp.asarray(band.reshape(k * self.kpad, self.wcp), jnp.bfloat16)

        bias_row = np.zeros((1, self.wcp), np.float32)
        bias_row[0, :W * cout] = np.tile(np.asarray(bias, np.float32), W)
        self.bias_row = jnp.asarray(bias_row)

        # Merged pooling + classifier head (one matmul, one 128-lane output slab):
        #   head = [ pool*inv_hw | pool*inv_hw @ fc_w^T ]  (padded to 128 lanes, bf16)
        inv_hw = 1.0 / float(H * W)
        pool = np.zeros((self.wcp, cout), np.float32)
        pool[:W * cout, :] = np.tile(np.eye(cout, dtype=np.float32), (W, 1))
        fc_wT = np.asarray(self.fc_w, np.float32).T                       # (cout, nc)
        self.out_lanes = _round_up(cout + num_classes, 128)
        head = np.zeros((self.wcp, self.out_lanes), np.float32)
        head[:, :cout] = pool * inv_hw
        head[:, cout:cout + num_classes] = (pool @ fc_wT) * inv_hw
        self.head = jnp.asarray(head, jnp.bfloat16)

        obias = np.zeros((1, self.out_lanes), np.float32)
        obias[0, cout:cout + num_classes] = np.asarray(self.fc_b, np.float32)
        self.obias = jnp.asarray(obias)

    def __call__(self, x_nchw):
        N, C, H, W = x_nchw.shape
        assert C == self.cin and (H, W) == (self.H, self.W), \
            "banded conv weights were built for feat_hw=%s" % ((self.H, self.W),)
        # images-per-grid-step: target >=256 LHS rows (fills v6e/v7x MXU), but keep the
        # grid length >= 2 when N allows it so v7x's two TensorCores both get work.
        nb_target = max(1, 256 // self.H)
        nb = max(1, min(nb_target, -(-N // 2)))
        # TODO(synk): BackBone also accepts a *list* of differently-sized images
        # (per-image features + concat of pooled embeddings); dynamic spatial shapes
        # have no clean static-shape Pallas equivalent, so only the tensor path is done.
        out = _backbone_forward(x_nchw, self.band2d, self.bias_row, self.head, self.obias,
                                k=self.k, H=self.H, W=self.W, kpad=self.kpad, nb=nb)
        embedding = out[:, :self.cout]
        logits = out[:, self.cout:self.cout + self.num_classes]
        return embedding, logits


if __name__ == "__main__":
    N, C, H, W = 2, 4, 16, 16
    x = jax.random.normal(jax.random.PRNGKey(0), (N, C, H, W), jnp.float32)

    model = BackBonePallas(cin=C, cout=32, k=3, num_classes=16, feat_hw=(H, W))
    embedding, logits = model(x)
    embedding, logits = jax.block_until_ready((embedding, logits))

    # ---- pure-JAX reference of the full BackBone forward ----
    conv = lax.conv_general_dilated(x, model.conv_w, (1, 1), "SAME",
                                    dimension_numbers=("NCHW", "OIHW", "NCHW"))
    conv = conv + model.conv_b.reshape(1, -1, 1, 1)
    scale = (model.bn_gamma / jnp.sqrt(model.bn_var + model.eps)).reshape(1, -1, 1, 1)
    feat = (conv - model.bn_mean.reshape(1, -1, 1, 1)) * scale + model.bn_beta.reshape(1, -1, 1, 1)
    feat = jnp.maximum(feat, 0.0)
    emb_ref = feat.mean(axis=(2, 3))                        # global average pool
    logits_ref = emb_ref @ model.fc_w.T + model.fc_b

    assert embedding.shape == (N, 32) and logits.shape == (N, 16)
    assert float(jnp.max(jnp.abs(embedding - emb_ref))) < 3e-2
    assert float(jnp.max(jnp.abs(logits - logits_ref))) < 3e-2
    print("KERNEL_OK")
</pallas_src>

<mosaic_0001>
module attributes {stable_mosaic.version = 11 : i64} {
  func.func @kernel(%arg0: i32, %arg1: memref<16x384xbf16, #tpu.memory_space<vmem>>, %arg2: memref<384x512xbf16, #tpu.memory_space<vmem>>, %arg3: memref<1x512xf32, #tpu.memory_space<vmem>>, %arg4: memref<512x128xbf16, #tpu.memory_space<vmem>>, %arg5: memref<1x128xf32, #tpu.memory_space<vmem>>, %arg6: memref<1x1x128xf32, #tpu.memory_space<vmem>>) attributes {dimension_semantics = [#tpu.dimension_semantics<parallel>], iteration_bounds = array<i64: 2>, scalar_prefetch = 0 : i64, scratch_operands = 0 : i64, tpu.core_type = #tpu.core_type<tc>, window_params = [{transform_indices = @transform_0, window_bounds = array<i64: 16, 384>}, {pipeline_mode = #tpu.pipeline_mode<synchronous>, transform_indices = @transform_1, window_bounds = array<i64: 384, 512>}, {pipeline_mode = #tpu.pipeline_mode<synchronous>, transform_indices = @transform_2, window_bounds = array<i64: 1, 512>}, {pipeline_mode = #tpu.pipeline_mode<synchronous>, transform_indices = @transform_3, window_bounds = array<i64: 512, 128>}, {pipeline_mode = #tpu.pipeline_mode<synchronous>, transform_indices = @transform_4, window_bounds = array<i64: 1, 128>}, {transform_indices = @transform_5, window_bounds = array<i64: 1, 1, 128>}]} {
    %c0 = arith.constant 0 : index
    %c0_0 = arith.constant 0 : index
    %0 = vector.load %arg1[%c0, %c0_0] : memref<16x384xbf16, #tpu.memory_space<vmem>>, vector<16x384xbf16>
    %c0_1 = arith.constant 0 : index
    %c0_2 = arith.constant 0 : index
    %1 = vector.load %arg2[%c0_1, %c0_2] : memref<384x512xbf16, #tpu.memory_space<vmem>>, vector<384x512xbf16>
    %cst = arith.constant dense<0.000000e+00> : vector<16x512xf32>
    %2 = tpu.matmul %0, %1, %cst {dimension_numbers = #tpu.dot_dimension_numbers<[1], [0], [0], [1], [0, 0, 1, 1], [], []>} : vector<16x384xbf16>, vector<384x512xbf16>, vector<16x512xf32> -> vector<16x512xf32>
    %c0_3 = arith.constant 0 : index
    %c0_4 = arith.constant 0 : index
    %3 = vector.load %arg3[%c0_3, %c0_4] : memref<1x512xf32, #tpu.memory_space<vmem>>, vector<1x512xf32>
    %4 = vector.broadcast %3 : vector<1x512xf32> to vector<16x512xf32>
    %5 = arith.addf %2, %4 : vector<16x512xf32>
    %cst_5 = arith.constant 0.000000e+00 : f32
    %6 = vector.broadcast %cst_5 : f32 to vector<16x512xf32>
    %7 = arith.maximumf %5, %6 : vector<16x512xf32>
    %8 = vector.shape_cast %7 : vector<16x512xf32> to vector<1x16x512xf32>
    %cst_6 = arith.constant dense<0.000000e+00> : vector<1x512xf32>
    %9 = vector.multi_reduction <add>, %8, %cst_6 [1] : vector<1x16x512xf32> to vector<1x512xf32>
    %10 = arith.truncf %9 : vector<1x512xf32> to vector<1x512xbf16>
    %c0_7 = arith.constant 0 : index
    %c0_8 = arith.constant 0 : index
    %11 = vector.load %arg4[%c0_7, %c0_8] : memref<512x128xbf16, #tpu.memory_space<vmem>>, vector<512x128xbf16>
    %cst_9 = arith.constant dense<0.000000e+00> : vector<1x128xf32>
    %12 = tpu.matmul %10, %11, %cst_9 {dimension_numbers = #tpu.dot_dimension_numbers<[1], [0], [0], [1], [0, 0, 1, 1], [], []>} : vector<1x512xbf16>, vector<512x128xbf16>, vector<1x128xf32> -> vector<1x128xf32>
    %c0_10 = arith.constant 0 : index
    %c0_11 = arith.constant 0 : index
    %13 = vector.load %arg5[%c0_10, %c0_11] : memref<1x128xf32, #tpu.memory_space<vmem>>, vector<1x128xf32>
    %14 = arith.addf %12, %13 : vector<1x128xf32>
    %c0_12 = arith.constant 0 : index
    %c0_13 = arith.constant 0 : index
    %c0_14 = arith.constant 0 : index
    %15 = vector.load %arg6[%c0_12, %c0_13, %c0_14] : memref<1x1x128xf32, #tpu.memory_space<vmem>>, vector<1x1x128xf32>
    %16 = vector.shape_cast %15 : vector<1x1x128xf32> to vector<1x128xf32>
    %17 = vector.shape_cast %14 : vector<1x128xf32> to vector<1x1x128xf32>
    tpu.vector_store %arg6[%c0_12, %c0_13, %c0_14], %17 {strides = array<i32>} : memref<1x1x128xf32, #tpu.memory_space<vmem>>, vector<1x1x128xf32>,
    return
  }
  func.func @transform_0(%arg0: i32) -> (i32, i32) {
    %c0_i32 = arith.constant 0 : i32
    %c0_i32_0 = arith.constant 0 : i32
    return %arg0, %c0_i32 : i32, i32
  }
  func.func @transform_1(%arg0: i32) -> (i32, i32) {
    %c0_i32 = arith.constant 0 : i32
    %c0_i32_0 = arith.constant 0 : i32
    %c0_i32_1 = arith.constant 0 : i32
    return %c0_i32, %c0_i32_0 : i32, i32
  }
  func.func @transform_2(%arg0: i32) -> (i32, i32) {
    %c0_i32 = arith.constant 0 : i32
    %c0_i32_0 = arith.constant 0 : i32
    %c0_i32_1 = arith.constant 0 : i32
    return %c0_i32, %c0_i32_0 : i32, i32
  }
  func.func @transform_3(%arg0: i32) -> (i32, i32) {
    %c0_i32 = arith.constant 0 : i32
    %c0_i32_0 = arith.constant 0 : i32
    %c0_i32_1 = arith.constant 0 : i32
    return %c0_i32, %c0_i32_0 : i32, i32
  }
  func.func @transform_4(%arg0: i32) -> (i32, i32) {
    %c0_i32 = arith.constant 0 : i32
    %c0_i32_0 = arith.constant 0 : i32
    %c0_i32_1 = arith.constant 0 : i32
    return %c0_i32, %c0_i32_0 : i32, i32
  }
  func.func @transform_5(%arg0: i32) -> (i32, i32, i32) {
    %c0_i32 = arith.constant 0 : i32
    %c0_i32_0 = arith.constant 0 : i32
    %c0_i32_1 = arith.constant 0 : i32
    return %arg0, %c0_i32, %c0_i32_0 : i32, i32, i32
  }
}

</mosaic_0001>

<llo_original>
// kernel: _backbone_forward.1
$region0: #{_backbone_forward.1}
  #allocation0 [shape = 'u32[]', space=smem, size = 0x4, offset = 0x4, fixed_abs, tag = 'smem constant byte address 0x4 - core index']
  #allocation1 [shape = 'u32[144,128]{1,0:T(1,128)}', space=vmem, size = 0x12000, scoped, tag = 'internal scratch']
  %s0 = inlined_call_operand.vmem [shape: bf16[32,384], index: 0, kind: input, shape index: {}]
  %s1 = inlined_call_operand.vmem [shape: bf16[384,512], index: 1, kind: input, shape index: {}]
  %s2 = inlined_call_operand.vmem [shape: f32[1,512], index: 2, kind: input, shape index: {}]
  %s3 = inlined_call_operand.vmem [shape: bf16[512,128], index: 3, kind: input, shape index: {}]
  %s4 = inlined_call_operand.vmem [shape: f32[1,128], index: 4, kind: input, shape index: {}]
  %s5 = inlined_call_operand.hbm [shape: f32[2,1,128], index: 5, kind: output, shape index: {}]
  %s6 = sld [smem:[#allocation0]]
  $region53: #{_backbone_forward.1} parent=0
    _
  %s8 = ssub.s32 1, %s6
  %s9 = scalar_select 0, %s8, %s6
  $region1: #{_backbone_forward.1} parent=0
    #allocation2 [shape = 'u8[1024]{0}', space=vmem, size = 0x400, scoped, tag = 'output window, operand 0']
    #allocation3 [shape = 's32[2]{0}', space=sflag, size = 0x8, scoped, tag = 'scoped memory for _backbone_forward.1']
    %10 = vsyncpa [#allocation3], 0
    %s11 = scalar_lea.sflag [#allocation3], 1
    %12 = vsyncpa %s11, 0
    loop: start=0, step=1, limit=4
    $region2: #{_backbone_forward.1} parent=1 // loop_pre_header
      _
    $region3: #{_backbone_forward.1} parent=1 // loop_header
      %s14 = sphi 0, %s18
      %p15 = scmp.ge.s32.totalorder %s14, 4
      %s24 = sphi 0, %s26
      %s27 = sphi 0, %s24
      %s28 = sphi 0, %s27
      %s44 = sphi 0, %s28
      %s48 = sphi 0, %s48
      %s50 = sphi 0, %s48
      %s51 = sphi 0, %s50
      %s65 = sphi 0, %s51
      %s69 = sphi 0, %s69
      %s71 = sphi 0, %s69
      %s72 = sphi 0, %s71
      %s86 = sphi 0, %s72
      %s90 = sphi 0, %s90
      %s92 = sphi 0, %s90
      %s93 = sphi 0, %s92
      %s107 = sphi 0, %s93
      %s111 = sphi 0, %s111
      %s113 = sphi 0, %s111
      %s114 = sphi 0, %s113
      %s128 = sphi 0, %s114
      %s134 = sphi 0, %s136
      %s137 = sphi 0, %s134
      %s138 = sphi 0, %s137
      %s154 = sphi 0, %s138
    $region4: #{_backbone_forward.1} parent=1 // loop_header_branch
      %17 = sbr.rel (%p15) target = $region8
    $region5: #{_backbone_forward.1} parent=1 // loop_body
      %s19 = ssub.s32 %s14, 1
      %s20 = ssub.s32 %s14, 2
      %s21 = sadd.s32 %s14, 1
      %s22 = ssub.s32 %s14, %s21
      %p23 = scmp.eq.s32.totalorder %s22, 0
      %s25 = sadd.s32 %s24, 1
      %s26 = scalar_select %p23, %s24, %s25
      %p29 = pneg %p23
      %p30 = scmp.eq.s32.totalorder %s14, 1
      %p31 = por %p29, %p30
      %p32 = scmp.ne.s32.totalorder %s24, %s27
      %p33 = scmp.eq.s32.totalorder %s14, 0
      %p34 = por %p32, %p33
      %p35 = scmp.ne.s32.totalorder %s24, %s27
      %p36 = scmp.eq.s32.totalorder %s19, 1
      %p37 = por %p35, %p36
      %p38 = scmp.ne.s32.totalorder %s27, %s28
      %p39 = scmp.eq.s32.totalorder %s19, 0
      %p40 = por %p38, %p39
      %p41 = scmp.ne.s32.totalorder %s27, %s28
      %p42 = scmp.eq.s32.totalorder %s20, 1
      %p43 = por %p41, %p42
      %p45 = scmp.ne.s32.totalorder %s28, %s44
      %p46 = scmp.eq.s32.totalorder %s20, 0
      %p47 = por %p45, %p46
      %s49 = sadd.s32 %s48, 1
      %p52 = scmp.eq.s32.totalorder %s14, 1
      %p53 = scmp.ne.s32.totalorder %s48, %s50
      %p54 = scmp.eq.s32.totalorder %s14, 0
      %p55 = por %p53, %p54
      %p56 = scmp.ne.s32.totalorder %s48, %s50
      %p57 = scmp.eq.s32.totalorder %s19, 1
      %p58 = por %p56, %p57
      %p59 = scmp.ne.s32.totalorder %s50, %s51
      %p60 = scmp.eq.s32.totalorder %s19, 0
      %p61 = por %p59, %p60
      %p62 = scmp.ne.s32.totalorder %s50, %s51
      %p63 = scmp.eq.s32.totalorder %s20, 1
      %p64 = por %p62, %p63
      %p66 = scmp.ne.s32.totalorder %s51, %s65
      %p67 = scmp.eq.s32.totalorder %s20, 0
      %p68 = por %p66, %p67
      %s70 = sadd.s32 %s69, 1
      %p73 = scmp.eq.s32.totalorder %s14, 1
      %p74 = scmp.ne.s32.totalorder %s69, %s71
      %p75 = scmp.eq.s32.totalorder %s14, 0
      %p76 = por %p74, %p75
      %p77 = scmp.ne.s32.totalorder %s69, %s71
      %p78 = scmp.eq.s32.totalorder %s19, 1
      %p79 = por %p77, %p78
      %p80 = scmp.ne.s32.totalorder %s71, %s72
      %p81 = scmp.eq.s32.totalorder %s19, 0
      %p82 = por %p80, %p81
      %p83 = scmp.ne.s32.totalorder %s71, %s72
      %p84 = scmp.eq.s32.totalorder %s20, 1
      %p85 = por %p83, %p84
      %p87 = scmp.ne.s32.totalorder %s72, %s86
      %p88 = scmp.eq.s32.totalorder %s20, 0
      %p89 = por %p87, %p88
      %s91 = sadd.s32 %s90, 1
      %p94 = scmp.eq.s32.totalorder %s14, 1
      %p95 = scmp.ne.s32.totalorder %s90, %s92
      %p96 = scmp.eq.s32.totalorder %s14, 0
      %p97 = por %p95, %p96
      %p98 = scmp.ne.s32.totalorder %s90, %s92
      %p99 = scmp.eq.s32.totalorder %s19, 1
      %p100 = por %p98, %p99
      %p101 = scmp.ne.s32.totalorder %s92, %s93
      %p102 = scmp.eq.s32.totalorder %s19, 0
      %p103 = por %p101, %p102
      %p104 = scmp.ne.s32.totalorder %s92, %s93
      %p105 = scmp.eq.s32.totalorder %s20, 1
      %p106 = por %p104, %p105
      %p108 = scmp.ne.s32.totalorder %s93, %s107
      %p109 = scmp.eq.s32.totalorder %s20, 0
      %p110 = por %p108, %p109
      %s112 = sadd.s32 %s111, 1
      %p115 = scmp.eq.s32.totalorder %s14, 1
      %p116 = scmp.ne.s32.totalorder %s111, %s113
      %p117 = scmp.eq.s32.totalorder %s14, 0
      %p118 = por %p116, %p117
      %p119 = scmp.ne.s32.totalorder %s111, %s113
      %p120 = scmp.eq.s32.totalorder %s19, 1
      %p121 = por %p119, %p120
      %p122 = scmp.ne.s32.totalorder %s113, %s114
      %p123 = scmp.eq.s32.totalorder %s19, 0
      %p124 = por %p122, %p123
      %p125 = scmp.ne.s32.totalorder %s113, %s114
      %p126 = scmp.eq.s32.totalorder %s20, 1
      %p127 = por %p125, %p126
      %p129 = scmp.ne.s32.totalorder %s114, %s128
      %p130 = scmp.eq.s32.totalorder %s20, 0
      %p131 = por %p129, %p130
      %s132 = ssub.s32 %s14, %s21
      %p133 = scmp.eq.s32.totalorder %s132, 0
      %s135 = sadd.s32 %s134, 1
      %s136 = scalar_select %p133, %s134, %s135
      %p139 = pneg %p133
      %p140 = scmp.eq.s32.totalorder %s14, 1
      %p141 = por %p139, %p140
      %p142 = scmp.ne.s32.totalorder %s134, %s137
      %p143 = scmp.eq.s32.totalorder %s14, 0
      %p144 = por %p142, %p143
      %p145 = scmp.ne.s32.totalorder %s134, %s137
      %p146 = scmp.eq.s32.totalorder %s19, 1
      %p147 = por %p145, %p146
      %p148 = scmp.ne.s32.totalorder %s137, %s138
      %p149 = scmp.eq.s32.totalorder %s19, 0
      %p150 = por %p148, %p149
      %p151 = scmp.ne.s32.totalorder %s137, %s138
      %p152 = scmp.eq.s32.totalorder %s20, 1
      %p153 = por %p151, %p152
      %p155 = scmp.ne.s32.totalorder %s138, %s154
      %p156 = scmp.eq.s32.totalorder %s20, 0
      %p157 = por %p155, %p156
      %p158 = scmp.le.s32.totalorder 1, %s14
      %p159 = scmp.lt.s32.totalorder %s14, 3
      %p160 = pnand %p158, %p159
      %p161 = pneg %p160
      // Predicated region
      $region9: #{_backbone_forward.1} parent=5 // pred_check
        _
      $region10: #{_backbone_forward.1} parent=5 // pred_check_branch
        %163 = sbr.rel (%p160) target = $region12
      $region11: #{_backbone_forward.1} parent=5 // pred_region
        %s164 = ssub.s32 %s14, 1
        // Predicated region
        $region13: #{_backbone_forward.1} parent=11 // pred_check
          %p165 = pneg %p61
        $region14: #{_backbone_forward.1} parent=11 // pred_check_branch
          %167 = sbr.rel (%p165) target = $region16
        $region15: #{_backbone_forward.1} parent=11 // pred_region
          _
        $region16: #{_backbone_forward.1} parent=11 // pred_fallthru
          _
        // Predicated region
        $region17: #{_backbone_forward.1} parent=11 // pred_check
          %p168 = pneg %p82
        $region18: #{_backbone_forward.1} parent=11 // pred_check_branch
          %170 = sbr.rel (%p168) target = $region20
        $region19: #{_backbone_forward.1} parent=11 // pred_region
          _
        $region20: #{_backbone_forward.1} parent=11 // pred_fallthru
          _
        // Predicated region
        $region21: #{_backbone_forward.1} parent=11 // pred_check
          %p171 = pneg %p103
        $region22: #{_backbone_forward.1} parent=11 // pred_check_branch
          %173 = sbr.rel (%p171) target = $region24
        $region23: #{_backbone_forward.1} parent=11 // pred_region
          _
        $region24: #{_backbone_forward.1} parent=11 // pred_fallthru
          _
        // Predicated region
        $region25: #{_backbone_forward.1} parent=11 // pred_check
          %p174 = pneg %p124
        $region26: #{_backbone_forward.1} parent=11 // pred_check_branch
          %176 = sbr.rel (%p174) target = $region28
        $region27: #{_backbone_forward.1} parent=11 // pred_region
          _
        $region28: #{_backbone_forward.1} parent=11 // pred_fallthru
          _
      $region12: #{_backbone_forward.1} parent=5 // pred_fallthru
        _
      %p177 = scmp.lt.s32.totalorder %s14, 2
      // Predicated region
      $region29: #{_backbone_forward.1} parent=5 // pred_check
        %p178 = pneg %p177
      $region30: #{_backbone_forward.1} parent=5 // pred_check_branch
        %180 = sbr.rel (%p178) target = $region32
      $region31: #{_backbone_forward.1} parent=5 // pred_region
        // Predicated region
        $region33: #{_backbone_forward.1} parent=31 // pred_check
          %p181 = pneg %p34
        $region34: #{_backbone_forward.1} parent=31 // pred_check_branch
          %183 = sbr.rel (%p181) target = $region36
        $region35: #{_backbone_forward.1} parent=31 // pred_region
          %s184 = smul.u32 2, %s14
          %p185 = scmp.lt.s32.totalorder %s184, 3
          %s186 = scalar_select %p185, %s184, 3
          %s187 = smul.addr %s186, 3
          %s188 = smul.addr %s187, 4
          %s189 = scalar_lea.vmem %s0, %s188
          %s190 = smul.u32 2, %s14
        $region36: #{_backbone_forward.1} parent=31 // pred_fallthru
          _
      $region32: #{_backbone_forward.1} parent=5 // pred_fallthru
        _
      %p191 = scmp.le.s32.totalorder 1, %s14
      %p192 = scmp.lt.s32.totalorder %s14, 3
      %p193 = pnand %p191, %p192
      %p194 = pneg %p193
      // Predicated region
      $region37: #{_backbone_forward.1} parent=5 // pred_check
        _
      $region38: #{_backbone_forward.1} parent=5 // pred_check_branch
        %196 = sbr.rel (%p193) target = $region40
      $region39: #{_backbone_forward.1} parent=5 // pred_region
        %s197 = ssub.s32 %s14, 1
        %s198 = smul.u32 2, %s19
        %p199 = scmp.lt.s32.totalorder %s198, 3
        %s200 = scalar_select %p199, %s198, 3
        %s201 = smul.addr %s200, 3
        %s202 = smul.addr %s201, 4
        %s203 = scalar_lea.vmem %s0, %s202
        %p204 = pneg %p40
        %p205 = pneg %p37
        %p206 = pneg %p61
        %p207 = pneg %p58
        %p208 = pneg %p82
        %p209 = pneg %p79
        %p210 = pneg %p103
        %p211 = pneg %p100
        %p212 = pneg %p124
        %p213 = pneg %p121
        %p214 = pneg %p150
        %p215 = pneg %p147
        %s216 = sand.u32 %s137, 1
        %s217 = scalar_lea.sflag [#allocation3], %s216
        %s218 = sand.u32 %s137, 1
        %s219 = scalar_lea.vmem [#allocation2], %s218
        %s220 = smul.u32 2, %s19
        %p221 = scmp.lt.s32.totalorder %s220, 3
        %s222 = scalar_select %p221, %s220, 3
        %s223 = smul.addr %s222, 3
        %s224 = smul.addr %s223, 4
        %s225 = scalar_lea.vmem %s0, %s224
        %s226 = smul.u32 2, %s19
        %v228 = vld [vmem:[%s225] sm:$0xff]
        %v229 = vld [vmem:[%s225 + $0x8] sm:$0xf]
        %v230 = vld [vmem:[%s225 + $0xc] sm:$0xff]
        %v231 = vld [vmem:[%s225 + $0x14] sm:$0xf]
        %v232 = vld [vmem:[%s1] sm:$0xff]
        %v233 = vld [vmem:[%s1 + $0x8] sm:$0xff]
        %v234 = vld [vmem:[%s1 + $0x10] sm:$0xff]
        %v235 = vld [vmem:[%s1 + $0x18] sm:$0xff]
        %v236 = vld [vmem:[%s1 + $0x20] sm:$0xff]
        %v237 = vld [vmem:[%s1 + $0x28] sm:$0xff]
        %v238 = vld [vmem:[%s1 + $0x30] sm:$0xff]
        %v239 = vld [vmem:[%s1 + $0x38] sm:$0xff]
        %v240 = vld [vmem:[%s1 + $0x40] sm:$0xff]
        %v241 = vld [vmem:[%s1 + $0x48] sm:$0xff]
        %v242 = vld [vmem:[%s1 + $0x50] sm:$0xff]
        %v243 = vld [vmem:[%s1 + $0x58] sm:$0xff]
        %v244 = vld [vmem:[%s1 + $0x60] sm:$0xff]
        %v245 = vld [vmem:[%s1 + $0x68] sm:$0xff]
        %v246 = vld [vmem:[%s1 + $0x70] sm:$0xff]
        %v247 = vld [vmem:[%s1 + $0x78] sm:$0xff]
        %v248 = vld [vmem:[%s1 + $0x80] sm:$0xff]
        %v249 = vld [vmem:[%s1 + $0x88] sm:$0xff]
        %v250 = vld [vmem:[%s1 + $0x90] sm:$0xff]
        %v251 = vld [vmem:[%s1 + $0x98] sm:$0xff]
        %v252 = vld [vmem:[%s1 + $0xa0] sm:$0xff]
        %v253 = vld [vmem:[%s1 + $0xa8] sm:$0xff]
        %v254 = vld [vmem:[%s1 + $0xb0] sm:$0xff]
        %v255 = vld [vmem:[%s1 + $0xb8] sm:$0xff]
        %v256 = vld [vmem:[%s1 + $0xc0] sm:$0xff]
        %v257 = vld [vmem:[%s1 + $0xc8] sm:$0xff]
        %v258 = vld [vmem:[%s1 + $0xd0] sm:$0xff]
        %v259 = vld [vmem:[%s1 + $0xd8] sm:$0xff]
        %v260 = vld [vmem:[%s1 + $0xe0] sm:$0xff]
        %v261 = vld [vmem:[%s1 + $0xe8] sm:$0xff]
        %v262 = vld [vmem:[%s1 + $0xf0] sm:$0xff]
        %v263 = vld [vmem:[%s1 + $0xf8] sm:$0xff]
        %v264 = vld [vmem:[%s1 + $0x100] sm:$0xff]
        %v265 = vld [vmem:[%s1 + $0x108] sm:$0xff]
        %v266 = vld [vmem:[%s1 + $0x110] sm:$0xff]
        %v267 = vld [vmem:[%s1 + $0x118] sm:$0xff]
        %v268 = vld [vmem:[%s1 + $0x120] sm:$0xff]
        %v269 = vld [vmem:[%s1 + $0x128] sm:$0xff]
        %v270 = vld [vmem:[%s1 + $0x130] sm:$0xff]
        %v271 = vld [vmem:[%s1 + $0x138] sm:$0xff]
        %v272 = vld [vmem:[%s1 + $0x140] sm:$0xff]
        %v273 = vld [vmem:[%s1 + $0x148] sm:$0xff]
        %v274 = vld [vmem:[%s1 + $0x150] sm:$0xff]
        %v275 = vld [vmem:[%s1 + $0x158] sm:$0xff]
        %v276 = vld [vmem:[%s1 + $0x160] sm:$0xff]
        %v277 = vld [vmem:[%s1 + $0x168] sm:$0xff]
        %v278 = vld [vmem:[%s1 + $0x170] sm:$0xff]
        %v279 = vld [vmem:[%s1 + $0x178] sm:$0xff]
        %v280 = vld [vmem:[%s1 + $0x180] sm:$0xff]
        %v281 = vld [vmem:[%s1 + $0x188] sm:$0xff]
        %v282 = vld [vmem:[%s1 + $0x190] sm:$0xff]
        %v283 = vld [vmem:[%s1 + $0x198] sm:$0xff]
        %v284 = vld [vmem:[%s1 + $0x1a0] sm:$0xff]
        %v285 = vld [vmem:[%s1 + $0x1a8] sm:$0xff]
        %v286 = vld [vmem:[%s1 + $0x1b0] sm:$0xff]
        %v287 = vld [vmem:[%s1 + $0x1b8] sm:$0xff]
        %v288 = vld [vmem:[%s1 + $0x1c0] sm:$0xff]
        %v289 = vld [vmem:[%s1 + $0x1c8] sm:$0xff]
        %v290 = vld [vmem:[%s1 + $0x1d0] sm:$0xff]
        %v291 = vld [vmem:[%s1 + $0x1d8] sm:$0xff]
        %v292 = vld [vmem:[%s1 + $0x1e0] sm:$0xff]
        %v293 = vld [vmem:[%s1 + $0x1e8] sm:$0xff]
        %v294 = vld [vmem:[%s1 + $0x1f0] sm:$0xff]
        %v295 = vld [vmem:[%s1 + $0x1f8] sm:$0xff]
        %v296 = vld [vmem:[%s1 + $0x200] sm:$0xff]
        %v297 = vld [vmem:[%s1 + $0x208] sm:$0xff]
        %v298 = vld [vmem:[%s1 + $0x210] sm:$0xff]
        %v299 = vld [vmem:[%s1 + $0x218] sm:$0xff]
        %v300 = vld [vmem:[%s1 + $0x220] sm:$0xff]
        %v301 = vld [vmem:[%s1 + $0x228] sm:$0xff]
        %v302 = vld [vmem:[%s1 + $0x230] sm:$0xff]
        %v303 = vld [vmem:[%s1 + $0x238] sm:$0xff]
        %v304 = vld [vmem:[%s1 + $0x240] sm:$0xff]
        %v305 = vld [vmem:[%s1 + $0x248] sm:$0xff]
        %v306 = vld [vmem:[%s1 + $0x250] sm:$0xff]
        %v307 = vld [vmem:[%s1 + $0x258] sm:$0xff]
        %v308 = vld [vmem:[%s1 + $0x260] sm:$0xff]
        %v309 = vld [vmem:[%s1 + $0x268] sm:$0xff]
        %v310 = vld [vmem:[%s1 + $0x270] sm:$0xff]
        %v311 = vld [vmem:[%s1 + $0x278] sm:$0xff]
        %v312 = vld [vmem:[%s1 + $0x280] sm:$0xff]
        %v313 = vld [vmem:[%s1 + $0x288] sm:$0xff]
        %v314 = vld [vmem:[%s1 + $0x290] sm:$0xff]
        %v315 = vld [vmem:[%s1 + $0x298] sm:$0xff]
        %v316 = vld [vmem:[%s1 + $0x2a0] sm:$0xff]
        %v317 = vld [vmem:[%s1 + $0x2a8] sm:$0xff]
        %v318 = vld [vmem:[%s1 + $0x2b0] sm:$0xff]
        %v319 = vld [vmem:[%s1 + $0x2b8] sm:$0xff]
        %v320 = vld [vmem:[%s1 + $0x2c0] sm:$0xff]
        %v321 = vld [vmem:[%s1 + $0x2c8] sm:$0xff]
        %v322 = vld [vmem:[%s1 + $0x2d0] sm:$0xff]
        %v323 = vld [vmem:[%s1 + $0x2d8] sm:$0xff]
        %v324 = vld [vmem:[%s1 + $0x2e0] sm:$0xff]
        %v325 = vld [vmem:[%s1 + $0x2e8] sm:$0xff]
        %v326 = vld [vmem:[%s1 + $0x2f0] sm:$0xff]
        %v327 = vld [vmem:[%s1 + $0x2f8] sm:$0xff]
        %v328 = vld [vmem:[%s2] sm:$0xf]
        %v330 = vlaneseq
        %v331 = vshrl.u32 %v330, 7
        %v332 = vsub.s32 0, %v331
        %v333 = vrot.slane %v328, %v332
        %v334 = vlaneseq
        %v335 = vshrl.u32 %v334, 7
        %v336 = vsub.s32 1, %v335
        %v337 = vrot.slane %v328, %v336
        %v338 = vlaneseq
        %v339 = vshrl.u32 %v338, 7
        %v340 = vsub.s32 2, %v339
        %v341 = vrot.slane %v328, %v340
        %v342 = vlaneseq
        %v343 = vshrl.u32 %v342, 7
        %v344 = vsub.s32 3, %v343
        %v345 = vrot.slane %v328, %v344
        %v354 = vunpack.c.l.b16 %v228
        %v355 = vunpack.c.h.b16 %v228
        %v356 = vunpack.c.l.b16 %v229
        %v357 = vunpack.c.l.b16 %v230
        %v358 = vunpack.c.h.b16 %v230
        %v359 = vunpack.c.l.b16 %v231
        %v360 = vpack.c.b16 %v357, %v354
        %v361 = vpack.c.b16 %v358, %v355
        %v362 = vpack.c.b16 %v359, %v356
        %v462 = vunpack.c.l.b16 %v232
        %v463 = vunpack.c.h.b16 %v232
        %v464 = vunpack.c.l.b16 %v233
        %v465 = vunpack.c.h.b16 %v233
        %v466 = vunpack.c.l.b16 %v234
        %v467 = vunpack.c.h.b16 %v234
        %v468 = vunpack.c.l.b16 %v235
        %v469 = vunpack.c.h.b16 %v235
        %v470 = vunpack.c.l.b16 %v236
        %v471 = vunpack.c.h.b16 %v236
        %v472 = vunpack.c.l.b16 %v237
        %v473 = vunpack.c.h.b16 %v237
        %v474 = vunpack.c.l.b16 %v238
        %v475 = vunpack.c.h.b16 %v238
        %v476 = vunpack.c.l.b16 %v239
        %v477 = vunpack.c.h.b16 %v239
        %v478 = vunpack.c.l.b16 %v240
        %v479 = vunpack.c.h.b16 %v240
        %v480 = vunpack.c.l.b16 %v241
        %v481 = vunpack.c.h.b16 %v241
        %v482 = vunpack.c.l.b16 %v242
        %v483 = vunpack.c.h.b16 %v242
        %v484 = vunpack.c.l.b16 %v243
        %v485 = vunpack.c.h.b16 %v243
        %v486 = vunpack.c.l.b16 %v244
        %v487 = vunpack.c.h.b16 %v244
        %v488 = vunpack.c.l.b16 %v245
        %v489 = vunpack.c.h.b16 %v245
        %v490 = vunpack.c.l.b16 %v246
        %v491 = vunpack.c.h.b16 %v246
        %v492 = vunpack.c.l.b16 %v247
        %v493 = vunpack.c.h.b16 %v247
        %v494 = vunpack.c.l.b16 %v248
        %v495 = vunpack.c.h.b16 %v248
        %v496 = vunpack.c.l.b16 %v249
        %v497 = vunpack.c.h.b16 %v249
        %v498 = vunpack.c.l.b16 %v250
        %v499 = vunpack.c.h.b16 %v250
        %v500 = vunpack.c.l.b16 %v251
        %v501 = vunpack.c.h.b16 %v251
        %v502 = vunpack.c.l.b16 %v252
        %v503 = vunpack.c.h.b16 %v252
        %v504 = vunpack.c.l.b16 %v253
        %v505 = vunpack.c.h.b16 %v253
        %v506 = vunpack.c.l.b16 %v254
        %v507 = vunpack.c.h.b16 %v254
        %v508 = vunpack.c.l.b16 %v255
        %v509 = vunpack.c.h.b16 %v255
        %v510 = vunpack.c.l.b16 %v256
        %v511 = vunpack.c.h.b16 %v256
        %v512 = vunpack.c.l.b16 %v257
        %v513 = vunpack.c.h.b16 %v257
        %v514 = vunpack.c.l.b16 %v258
        %v515 = vunpack.c.h.b16 %v258
        %v516 = vunpack.c.l.b16 %v259
        %v517 = vunpack.c.h.b16 %v259
        %v518 = vunpack.c.l.b16 %v260
        %v519 = vunpack.c.h.b16 %v260
        %v520 = vunpack.c.l.b16 %v261
        %v521 = vunpack.c.h.b16 %v261
        %v522 = vunpack.c.l.b16 %v262
        %v523 = vunpack.c.h.b16 %v262
        %v524 = vunpack.c.l.b16 %v263
        %v525 = vunpack.c.h.b16 %v263
        %v526 = vunpack.c.l.b16 %v264
        %v527 = vunpack.c.h.b16 %v264
        %v528 = vunpack.c.l.b16 %v265
        %v529 = vunpack.c.h.b16 %v265
        %v530 = vunpack.c.l.b16 %v266
        %v531 = vunpack.c.h.b16 %v266
        %v532 = vunpack.c.l.b16 %v267
        %v533 = vunpack.c.h.b16 %v267
        %v534 = vunpack.c.l.b16 %v268
        %v535 = vunpack.c.h.b16 %v268
        %v536 = vunpack.c.l.b16 %v269
        %v537 = vunpack.c.h.b16 %v269
        %v538 = vunpack.c.l.b16 %v270
        %v539 = vunpack.c.h.b16 %v270
        %v540 = vunpack.c.l.b16 %v271
        %v541 = vunpack.c.h.b16 %v271
        %v542 = vunpack.c.l.b16 %v272
        %v543 = vunpack.c.h.b16 %v272
        %v544 = vunpack.c.l.b16 %v273
        %v545 = vunpack.c.h.b16 %v273
        %v546 = vunpack.c.l.b16 %v274
        %v547 = vunpack.c.h.b16 %v274
        %v548 = vunpack.c.l.b16 %v275
        %v549 = vunpack.c.h.b16 %v275
        %v550 = vunpack.c.l.b16 %v276
        %v551 = vunpack.c.h.b16 %v276
        %v552 = vunpack.c.l.b16 %v277
        %v553 = vunpack.c.h.b16 %v277
        %v554 = vunpack.c.l.b16 %v278
        %v555 = vunpack.c.h.b16 %v278
        %v556 = vunpack.c.l.b16 %v279
        %v557 = vunpack.c.h.b16 %v279
        %v558 = vunpack.c.l.b16 %v280
        %v559 = vunpack.c.h.b16 %v280
        %v560 = vunpack.c.l.b16 %v281
        %v561 = vunpack.c.h.b16 %v281
        %v562 = vunpack.c.l.b16 %v282
        %v563 = vunpack.c.h.b16 %v282
        %v564 = vunpack.c.l.b16 %v283
        %v565 = vunpack.c.h.b16 %v283
        %v566 = vunpack.c.l.b16 %v284
        %v567 = vunpack.c.h.b16 %v284
        %v568 = vunpack.c.l.b16 %v285
        %v569 = vunpack.c.h.b16 %v285
        %v570 = vunpack.c.l.b16 %v286
        %v571 = vunpack.c.h.b16 %v286
        %v572 = vunpack.c.l.b16 %v287
        %v573 = vunpack.c.h.b16 %v287
        %v574 = vunpack.c.l.b16 %v288
        %v575 = vunpack.c.h.b16 %v288
        %v576 = vunpack.c.l.b16 %v289
        %v577 = vunpack.c.h.b16 %v289
        %v578 = vunpack.c.l.b16 %v290
        %v579 = vunpack.c.h.b16 %v290
        %v580 = vunpack.c.l.b16 %v291
        %v581 = vunpack.c.h.b16 %v291
        %v582 = vunpack.c.l.b16 %v292
        %v583 = vunpack.c.h.b16 %v292
        %v584 = vunpack.c.l.b16 %v293
        %v585 = vunpack.c.h.b16 %v293
        %v586 = vunpack.c.l.b16 %v294
        %v587 = vunpack.c.h.b16 %v294
        %v588 = vunpack.c.l.b16 %v295
        %v589 = vunpack.c.h.b16 %v295
        %v590 = vunpack.c.l.b16 %v296
        %v591 = vunpack.c.h.b16 %v296
        %v592 = vunpack.c.l.b16 %v297
        %v593 = vunpack.c.h.b16 %v297
        %v594 = vunpack.c.l.b16 %v298
        %v595 = vunpack.c.h.b16 %v298
        %v596 = vunpack.c.l.b16 %v299
        %v597 = vunpack.c.h.b16 %v299
        %v598 = vunpack.c.l.b16 %v300
        %v599 = vunpack.c.h.b16 %v300
        %v600 = vunpack.c.l.b16 %v301
        %v601 = vunpack.c.h.b16 %v301
        %v602 = vunpack.c.l.b16 %v302
        %v603 = vunpack.c.h.b16 %v302
        %v604 = vunpack.c.l.b16 %v303
        %v605 = vunpack.c.h.b16 %v303
        %v606 = vunpack.c.l.b16 %v304
        %v607 = vunpack.c.h.b16 %v304
        %v608 = vunpack.c.l.b16 %v305
        %v609 = vunpack.c.h.b16 %v305
        %v610 = vunpack.c.l.b16 %v306
        %v611 = vunpack.c.h.b16 %v306
        %v612 = vunpack.c.l.b16 %v307
        %v613 = vunpack.c.h.b16 %v307
        %v614 = vunpack.c.l.b16 %v308
        %v615 = vunpack.c.h.b16 %v308
        %v616 = vunpack.c.l.b16 %v309
        %v617 = vunpack.c.h.b16 %v309
        %v618 = vunpack.c.l.b16 %v310
        %v619 = vunpack.c.h.b16 %v310
        %v620 = vunpack.c.l.b16 %v311
        %v621 = vunpack.c.h.b16 %v311
        %v622 = vunpack.c.l.b16 %v312
        %v623 = vunpack.c.h.b16 %v312
        %v624 = vunpack.c.l.b16 %v313
        %v625 = vunpack.c.h.b16 %v313
        %v626 = vunpack.c.l.b16 %v314
        %v627 = vunpack.c.h.b16 %v314
        %v628 = vunpack.c.l.b16 %v315
        %v629 = vunpack.c.h.b16 %v315
        %v630 = vunpack.c.l.b16 %v316
        %v631 = vunpack.c.h.b16 %v316
        %v632 = vunpack.c.l.b16 %v317
        %v633 = vunpack.c.h.b16 %v317
        %v634 = vunpack.c.l.b16 %v318
        %v635 = vunpack.c.h.b16 %v318
        %v636 = vunpack.c.l.b16 %v319
        %v637 = vunpack.c.h.b16 %v319
        %v638 = vunpack.c.l.b16 %v320
        %v639 = vunpack.c.h.b16 %v320
        %v640 = vunpack.c.l.b16 %v321
        %v641 = vunpack.c.h.b16 %v321
        %v642 = vunpack.c.l.b16 %v322
        %v643 = vunpack.c.h.b16 %v322
        %v644 = vunpack.c.l.b16 %v323
        %v645 = vunpack.c.h.b16 %v323
        %v646 = vunpack.c.l.b16 %v324
        %v647 = vunpack.c.h.b16 %v324
        %v648 = vunpack.c.l.b16 %v325
        %v649 = vunpack.c.h.b16 %v325
        %v650 = vunpack.c.l.b16 %v326
        %v651 = vunpack.c.h.b16 %v326
        %v652 = vunpack.c.l.b16 %v327
        %v653 = vunpack.c.h.b16 %v327
        %v654 = vpack.c.b16 %v466, %v462
        %v655 = vpack.c.b16 %v467, %v463
        %v656 = vpack.c.b16 %v468, %v464
        %v657 = vpack.c.b16 %v469, %v465
        %v658 = vpack.c.b16 %v474, %v470
        %v659 = vpack.c.b16 %v475, %v471
        %v660 = vpack.c.b16 %v476, %v472
        %v661 = vpack.c.b16 %v477, %v473
        %v662 = vpack.c.b16 %v482, %v478
        %v663 = vpack.c.b16 %v483, %v479
        %v664 = vpack.c.b16 %v484, %v480
        %v665 = vpack.c.b16 %v485, %v481
        %v666 = vpack.c.b16 %v490, %v486
        %v667 = vpack.c.b16 %v491, %v487
        %v668 = vpack.c.b16 %v492, %v488
        %v669 = vpack.c.b16 %v493, %v489
        %v670 = vpack.c.b16 %v498, %v494
        %v671 = vpack.c.b16 %v499, %v495
        %v672 = vpack.c.b16 %v500, %v496
        %v673 = vpack.c.b16 %v501, %v497
        %v674 = vpack.c.b16 %v506, %v502
        %v675 = vpack.c.b16 %v507, %v503
        %v676 = vpack.c.b16 %v508, %v504
        %v677 = vpack.c.b16 %v509, %v505
        %v678 = vpack.c.b16 %v514, %v510
        %v679 = vpack.c.b16 %v515, %v511
        %v680 = vpack.c.b16 %v516, %v512
        %v681 = vpack.c.b16 %v517, %v513
        %v682 = vpack.c.b16 %v522, %v518
        %v683 = vpack.c.b16 %v523, %v519
        %v684 = vpack.c.b16 %v524, %v520
        %v685 = vpack.c.b16 %v525, %v521
        %v686 = vpack.c.b16 %v530, %v526
        %v687 = vpack.c.b16 %v531, %v527
        %v688 = vpack.c.b16 %v532, %v528
        %v689 = vpack.c.b16 %v533, %v529
        %v690 = vpack.c.b16 %v538, %v534
        %v691 = vpack.c.b16 %v539, %v535
        %v692 = vpack.c.b16 %v540, %v536
        %v693 = vpack.c.b16 %v541, %v537
        %v694 = vpack.c.b16 %v546, %v542
        %v695 = vpack.c.b16 %v547, %v543
        %v696 = vpack.c.b16 %v548, %v544
        %v697 = vpack.c.b16 %v549, %v545
        %v698 = vpack.c.b16 %v554, %v550
        %v699 = vpack.c.b16 %v555, %v551
        %v700 = vpack.c.b16 %v556, %v552
        %v701 = vpack.c.b16 %v557, %v553
        %v702 = vpack.c.b16 %v562, %v558
        %v703 = vpack.c.b16 %v563, %v559
        %v704 = vpack.c.b16 %v564, %v560
        %v705 = vpack.c.b16 %v565, %v561
        %v706 = vpack.c.b16 %v570, %v566
        %v707 = vpack.c.b16 %v571, %v567
        %v708 = vpack.c.b16 %v572, %v568
        %v709 = vpack.c.b16 %v573, %v569
        %v710 = vpack.c.b16 %v578, %v574
        %v711 = vpack.c.b16 %v579, %v575
        %v712 = vpack.c.b16 %v580, %v576
        %v713 = vpack.c.b16 %v581, %v577
        %v714 = vpack.c.b16 %v586, %v582
        %v715 = vpack.c.b16 %v587, %v583
        %v716 = vpack.c.b16 %v588, %v584
        %v717 = vpack.c.b16 %v589, %v585
        %v718 = vpack.c.b16 %v594, %v590
        %v719 = vpack.c.b16 %v595, %v591
        %v720 = vpack.c.b16 %v596, %v592
        %v721 = vpack.c.b16 %v597, %v593
        %v722 = vpack.c.b16 %v602, %v598
        %v723 = vpack.c.b16 %v603, %v599
        %v724 = vpack.c.b16 %v604, %v600
        %v725 = vpack.c.b16 %v605, %v601
        %v726 = vpack.c.b16 %v610, %v606
        %v727 = vpack.c.b16 %v611, %v607
        %v728 = vpack.c.b16 %v612, %v608
        %v729 = vpack.c.b16 %v613, %v609
        %v730 = vpack.c.b16 %v618, %v614
        %v731 = vpack.c.b16 %v619, %v615
        %v732 = vpack.c.b16 %v620, %v616
        %v733 = vpack.c.b16 %v621, %v617
        %v734 = vpack.c.b16 %v626, %v622
        %v735 = vpack.c.b16 %v627, %v623
        %v736 = vpack.c.b16 %v628, %v624
        %v737 = vpack.c.b16 %v629, %v625
        %v738 = vpack.c.b16 %v634, %v630
        %v739 = vpack.c.b16 %v635, %v631
        %v740 = vpack.c.b16 %v636, %v632
        %v741 = vpack.c.b16 %v637, %v633
        %v742 = vpack.c.b16 %v642, %v638
        %v743 = vpack.c.b16 %v643, %v639
        %v744 = vpack.c.b16 %v644, %v640
        %v745 = vpack.c.b16 %v645, %v641
        %v746 = vpack.c.b16 %v650, %v646
        %v747 = vpack.c.b16 %v651, %v647
        %v748 = vpack.c.b16 %v652, %v648
        %v749 = vpack.c.b16 %v653, %v649
        %846 = vmatprep.subr.bf16.mxu0 %v655
        %847 = vmatpush1.bf16.msra.mxu0 %v654
        %848 = vmatprep.subr.bf16.mxu0 %v659
        %849 = vmatpush1.bf16.msra.mxu0 %v658
        %850 = vmatprep.subr.bf16.mxu0 %v663
        %851 = vmatpush1.bf16.msra.mxu0 %v662
        %852 = vmatprep.subr.bf16.mxu0 %v667
        %853 = vmatpush1.bf16.msra.mxu0 %v666
        %854 = vmatprep.subr.bf16.mxu0 %v671
        %855 = vmatpush1.bf16.msra.mxu0 %v670
        %856 = vmatprep.subr.bf16.mxu0 %v675
        %857 = vmatpush1.bf16.msra.mxu0 %v674
        %858 = vmatprep.subr.bf16.mxu0 %v679
        %859 = vmatpush1.bf16.msra.mxu0 %v678
        %860 = vmatprep.subr.bf16.mxu0 %v683
        %861 = vmatpush1.bf16.msra.mxu0 %v682
        %862 = vmatprep.subr.bf16.mxu0 %v687
        %863 = vmatpush1.bf16.msra.mxu0 %v686
        %864 = vmatprep.subr.bf16.mxu0 %v691
        %865 = vmatpush1.bf16.msra.mxu0 %v690
        %866 = vmatprep.subr.bf16.mxu0 %v695
        %867 = vmatpush1.bf16.msra.mxu0 %v694
        %868 = vmatprep.subr.bf16.mxu0 %v699
        %869 = vmatpush1.bf16.msra.mxu0 %v698
        %870 = vmatprep.subr.bf16.mxu0 %v703
        %871 = vmatpush1.bf16.msra.mxu0 %v702
        %872 = vmatprep.subr.bf16.mxu0 %v707
        %873 = vmatpush1.bf16.msra.mxu0 %v706
        %874 = vmatprep.subr.bf16.mxu0 %v711
        %875 = vmatpush1.bf16.msra.mxu0 %v710
        %876 = vmatprep.subr.bf16.mxu0 %v715
        %877 = vmatpush1.bf16.msra.mxu0 %v714
        %878 = vmatprep.mubr.bf16.mxu0 %v361
        %879 = vmatmul.mubr.bf16.gmra.mrb[0].mxu0 %v360
        %v880 = vpop.f32.mrb[0].mxu0
        %v881 = vadd.f32 %v333, %v880
        %v882 = vpop.f32.mrb[0].mxu0
        %v883 = vadd.f32 %v337, %v882
        %v884 = vpop.f32.mrb[0].mxu0
        %v885 = vadd.f32 %v333, %v884
        %v886 = vpop.f32.mrb[0].mxu0
        %v887 = vadd.f32 %v337, %v886
        %888 = vdwg.mxu0
        %889 = vmatprep.subr.bf16.mxu0 %v719
        %890 = vmatpush1.bf16.msra.mxu0 %v718
        %891 = vmatprep.subr.bf16.mxu0 %v723
        %892 = vmatpush1.bf16.msra.mxu0 %v722
        %893 = vmatprep.subr.bf16.mxu0 %v727
        %894 = vmatpush1.bf16.msra.mxu0 %v726
        %895 = vmatprep.subr.bf16.mxu0 %v731
        %896 = vmatpush1.bf16.msra.mxu0 %v730
        %897 = vmatprep.subr.bf16.mxu0 %v735
        %898 = vmatpush1.bf16.msra.mxu0 %v734
        %899 = vmatprep.subr.bf16.mxu0 %v739
        %900 = vmatpush1.bf16.msra.mxu0 %v738
        %901 = vmatprep.subr.bf16.mxu0 %v743
        %902 = vmatpush1.bf16.msra.mxu0 %v742
        %903 = vmatprep.subr.bf16.mxu0 %v747
        %904 = vmatpush1.bf16.msra.mxu0 %v746
        %905 = vmatprep.subr.bf16.mxu0 0
        %906 = vmatpush1.bf16.msra.mxu0 0
        %907 = vmatprep.subr.bf16.mxu0 0
        %908 = vmatpush1.bf16.msra.mxu0 0
        %909 = vmatprep.subr.bf16.mxu0 0
        %910 = vmatpush1.bf16.msra.mxu0 0
        %911 = vmatprep.subr.bf16.mxu0 0
        %912 = vmatpush1.bf16.msra.mxu0 0
        %913 = vmatprep.subr.bf16.mxu0 0
        %914 = vmatpush1.bf16.msra.mxu0 0
        %915 = vmatprep.subr.bf16.mxu0 0
        %916 = vmatpush1.bf16.msra.mxu0 0
        %917 = vmatprep.subr.bf16.mxu0 0
        %918 = vmatpush1.bf16.msra.mxu0 0
        %919 = vmatprep.subr.bf16.mxu0 0
        %920 = vmatpush1.bf16.msra.mxu0 0
        %921 = vmatprep.mubr.bf16.mxu0 0
        %922 = vmatmul.mubr.bf16.gmra.mrb[0].mxu0 %v362
        %v923 = vpop.f32.mrb[0].mxu0
        %v924 = vadd.f32 %v881, %v923
        %v925 = vpop.f32.mrb[0].mxu0
        %v926 = vadd.f32 %v883, %v925
        %v927 = vpop.f32.mrb[0].mxu0
        %v928 = vadd.f32 %v885, %v927
        %v929 = vpop.f32.mrb[0].mxu0
        %v930 = vadd.f32 %v887, %v929
        %931 = vdwg.mxu0
        %932 = vmatprep.subr.bf16.mxu0 %v657
        %933 = vmatpush1.bf16.msra.mxu0 %v656
        %934 = vmatprep.subr.bf16.mxu0 %v661
        %935 = vmatpush1.bf16.msra.mxu0 %v660
        %936 = vmatprep.subr.bf16.mxu0 %v665
        %937 = vmatpush1.bf16.msra.mxu0 %v664
        %938 = vmatprep.subr.bf16.mxu0 %v669
        %939 = vmatpush1.bf16.msra.mxu0 %v668
        %940 = vmatprep.subr.bf16.mxu0 %v673
        %941 = vmatpush1.bf16.msra.mxu0 %v672
        %942 = vmatprep.subr.bf16.mxu0 %v677
        %943 = vmatpush1.bf16.msra.mxu0 %v676
        %944 = vmatprep.subr.bf16.mxu0 %v681
        %945 = vmatpush1.bf16.msra.mxu0 %v680
        %946 = vmatprep.subr.bf16.mxu0 %v685
        %947 = vmatpush1.bf16.msra.mxu0 %v684
        %948 = vmatprep.subr.bf16.mxu0 %v689
        %949 = vmatpush1.bf16.msra.mxu0 %v688
        %950 = vmatprep.subr.bf16.mxu0 %v693
        %951 = vmatpush1.bf16.msra.mxu0 %v692
        %952 = vmatprep.subr.bf16.mxu0 %v697
        %953 = vmatpush1.bf16.msra.mxu0 %v696
        %954 = vmatprep.subr.bf16.mxu0 %v701
        %955 = vmatpush1.bf16.msra.mxu0 %v700
        %956 = vmatprep.subr.bf16.mxu0 %v705
        %957 = vmatpush1.bf16.msra.mxu0 %v704
        %958 = vmatprep.subr.bf16.mxu0 %v709
        %959 = vmatpush1.bf16.msra.mxu0 %v708
        %960 = vmatprep.subr.bf16.mxu0 %v713
        %961 = vmatpush1.bf16.msra.mxu0 %v712
        %962 = vmatprep.subr.bf16.mxu0 %v717
        %963 = vmatpush1.bf16.msra.mxu0 %v716
        %964 = vmatprep.mubr.bf16.mxu0 %v361
        %965 = vmatmul.mubr.bf16.gmra.mrb[0].mxu0 %v360
        %v966 = vpop.f32.mrb[0].mxu0
        %v967 = vadd.f32 %v341, %v966
        %v968 = vpop.f32.mrb[0].mxu0
        %v969 = vadd.f32 %v345, %v968
        %v970 = vpop.f32.mrb[0].mxu0
        %v971 = vadd.f32 %v341, %v970
        %v972 = vpop.f32.mrb[0].mxu0
        %v973 = vadd.f32 %v345, %v972
        %974 = vdwg.mxu0
        %975 = vmatprep.subr.bf16.mxu0 %v721
        %976 = vmatpush1.bf16.msra.mxu0 %v720
        %977 = vmatprep.subr.bf16.mxu0 %v725
        %978 = vmatpush1.bf16.msra.mxu0 %v724
        %979 = vmatprep.subr.bf16.mxu0 %v729
        %980 = vmatpush1.bf16.msra.mxu0 %v728
        %981 = vmatprep.subr.bf16.mxu0 %v733
        %982 = vmatpush1.bf16.msra.mxu0 %v732
        %983 = vmatprep.subr.bf16.mxu0 %v737
        %984 = vmatpush1.bf16.msra.mxu0 %v736
        %985 = vmatprep.subr.bf16.mxu0 %v741
        %986 = vmatpush1.bf16.msra.mxu0 %v740
        %987 = vmatprep.subr.bf16.mxu0 %v745
        %988 = vmatpush1.bf16.msra.mxu0 %v744
        %989 = vmatprep.subr.bf16.mxu0 %v749
        %990 = vmatpush1.bf16.msra.mxu0 %v748
        %991 = vmatprep.subr.bf16.mxu0 0
        %992 = vmatpush1.bf16.msra.mxu0 0
        %993 = vmatprep.subr.bf16.mxu0 0
        %994 = vmatpush1.bf16.msra.mxu0 0
        %995 = vmatprep.subr.bf16.mxu0 0
        %996 = vmatpush1.bf16.msra.mxu0 0
        %997 = vmatprep.subr.bf16.mxu0 0
        %998 = vmatpush1.bf16.msra.mxu0 0
        %999 = vmatprep.subr.bf16.mxu0 0
        %1000 = vmatpush1.bf16.msra.mxu0 0
        %1001 = vmatprep.subr.bf16.mxu0 0
        %1002 = vmatpush1.bf16.msra.mxu0 0
        %1003 = vmatprep.subr.bf16.mxu0 0
        %1004 = vmatpush1.bf16.msra.mxu0 0
        %1005 = vmatprep.subr.bf16.mxu0 0
        %1006 = vmatpush1.bf16.msra.mxu0 0
        %1007 = vmatprep.mubr.bf16.mxu0 0
        %1008 = vmatmul.mubr.bf16.gmra.mrb[0].mxu0 %v362
        %v1009 = vpop.f32.mrb[0].mxu0
        %v1010 = vadd.f32 %v967, %v1009
        %v1011 = vpop.f32.mrb[0].mxu0
        %v1012 = vadd.f32 %v969, %v1011
        %v1013 = vpop.f32.mrb[0].mxu0
        %v1014 = vadd.f32 %v971, %v1013
        %v1015 = vpop.f32.mrb[0].mxu0
        %v1016 = vadd.f32 %v973, %v1015
        %1017 = vdwg.mxu0
        %v1018 = vmax.f32 %v924, 0.0
        %v1019 = vmax.f32 %v926, 0.0
        %v1020 = vmax.f32 %v1010, 0.0
        %v1021 = vmax.f32 %v1012, 0.0
        %v1022 = vmax.f32 %v928, 0.0
        %v1023 = vmax.f32 %v930, 0.0
        %v1024 = vmax.f32 %v1014, 0.0
        %v1025 = vmax.f32 %v1016, 0.0
        %v1026 = vadd.f32 %v1018, %v1022
        %v1027 = vrot.slane %v1026, 4
        %v1028 = vadd.f32 %v1026, %v1027
        %v1029 = vrot.slane %v1028, 2
        %v1030 = vadd.f32 %v1028, %v1029
        %v1031 = vrot.slane %v1030, 1
        %v1032 = vadd.f32 %v1030, %v1031
        %v1033 = vadd.f32 %v1019, %v1023
        %v1034 = vrot.slane %v1033, 4
        %v1035 = vadd.f32 %v1033, %v1034
        %v1036 = vrot.slane %v1035, 2
        %v1037 = vadd.f32 %v1035, %v1036
        %v1038 = vrot.slane %v1037, 1
        %v1039 = vadd.f32 %v1037, %v1038
        %v1040 = vadd.f32 %v1020, %v1024
        %v1041 = vrot.slane %v1040, 4
        %v1042 = vadd.f32 %v1040, %v1041
        %v1043 = vrot.slane %v1042, 2
        %v1044 = vadd.f32 %v1042, %v1043
        %v1045 = vrot.slane %v1044, 1
        %v1046 = vadd.f32 %v1044, %v1045
        %v1047 = vadd.f32 %v1021, %v1025
        %v1048 = vrot.slane %v1047, 4
        %v1049 = vadd.f32 %v1047, %v1048
        %v1050 = vrot.slane %v1049, 2
        %v1051 = vadd.f32 %v1049, %v1050
        %v1052 = vrot.slane %v1051, 1
        %v1053 = vadd.f32 %v1051, %v1052
        %v1054 = vpack.c.bf16 %v1032, %v1032
        %v1055 = vpack.c.bf16 %v1039, %v1039
        %v1056 = vpack.c.bf16 %v1046, %v1046
        %v1057 = vpack.c.bf16 %v1053, %v1053
        %v1058 = vld [vmem:[%s3] sm:$0xf]
        %v1059 = vld [vmem:[%s3 + $0x4] sm:$0xf]
        %v1060 = vld [vmem:[%s3 + $0x8] sm:$0xf]
        %v1061 = vld [vmem:[%s3 + $0xc] sm:$0xf]
        %v1062 = vld [vmem:[%s3 + $0x10] sm:$0xf]
        %v1063 = vld [vmem:[%s3 + $0x14] sm:$0xf]
        %v1064 = vld [vmem:[%s3 + $0x18] sm:$0xf]
        %v1065 = vld [vmem:[%s3 + $0x1c] sm:$0xf]
        %v1066 = vld [vmem:[%s3 + $0x20] sm:$0xf]
        %v1067 = vld [vmem:[%s3 + $0x24] sm:$0xf]
        %v1068 = vld [vmem:[%s3 + $0x28] sm:$0xf]
        %v1069 = vld [vmem:[%s3 + $0x2c] sm:$0xf]
        %v1070 = vld [vmem:[%s3 + $0x30] sm:$0xf]
        %v1071 = vld [vmem:[%s3 + $0x34] sm:$0xf]
        %v1072 = vld [vmem:[%s3 + $0x38] sm:$0xf]
        %v1073 = vld [vmem:[%s3 + $0x3c] sm:$0xf]
        %v1074 = vld [vmem:[%s3 + $0x40] sm:$0xf]
        %v1075 = vld [vmem:[%s3 + $0x44] sm:$0xf]
        %v1076 = vld [vmem:[%s3 + $0x48] sm:$0xf]
        %v1077 = vld [vmem:[%s3 + $0x4c] sm:$0xf]
        %v1078 = vld [vmem:[%s3 + $0x50] sm:$0xf]
        %v1079 = vld [vmem:[%s3 + $0x54] sm:$0xf]
        %v1080 = vld [vmem:[%s3 + $0x58] sm:$0xf]
        %v1081 = vld [vmem:[%s3 + $0x5c] sm:$0xf]
        %v1082 = vld [vmem:[%s3 + $0x60] sm:$0xf]
        %v1083 = vld [vmem:[%s3 + $0x64] sm:$0xf]
        %v1084 = vld [vmem:[%s3 + $0x68] sm:$0xf]
        %v1085 = vld [vmem:[%s3 + $0x6c] sm:$0xf]
        %v1086 = vld [vmem:[%s3 + $0x70] sm:$0xf]
        %v1087 = vld [vmem:[%s3 + $0x74] sm:$0xf]
        %v1088 = vld [vmem:[%s3 + $0x78] sm:$0xf]
        %v1089 = vld [vmem:[%s3 + $0x7c] sm:$0xf]
        %v1090 = vld [vmem:[%s3 + $0x80] sm:$0xf]
        %v1091 = vld [vmem:[%s3 + $0x84] sm:$0xf]
        %v1092 = vld [vmem:[%s3 + $0x88] sm:$0xf]
        %v1093 = vld [vmem:[%s3 + $0x8c] sm:$0xf]
        %v1094 = vld [vmem:[%s3 + $0x90] sm:$0xf]
        %v1095 = vld [vmem:[%s3 + $0x94] sm:$0xf]
        %v1096 = vld [vmem:[%s3 + $0x98] sm:$0xf]
        %v1097 = vld [vmem:[%s3 + $0x9c] sm:$0xf]
        %v1098 = vld [vmem:[%s3 + $0xa0] sm:$0xf]
        %v1099 = vld [vmem:[%s3 + $0xa4] sm:$0xf]
        %v1100 = vld [vmem:[%s3 + $0xa8] sm:$0xf]
        %v1101 = vld [vmem:[%s3 + $0xac] sm:$0xf]
        %v1102 = vld [vmem:[%s3 + $0xb0] sm:$0xf]
        %v1103 = vld [vmem:[%s3 + $0xb4] sm:$0xf]
        %v1104 = vld [vmem:[%s3 + $0xb8] sm:$0xf]
        %v1105 = vld [vmem:[%s3 + $0xbc] sm:$0xf]
        %v1106 = vld [vmem:[%s3 + $0xc0] sm:$0xf]
        %v1107 = vld [vmem:[%s3 + $0xc4] sm:$0xf]
        %v1108 = vld [vmem:[%s3 + $0xc8] sm:$0xf]
        %v1109 = vld [vmem:[%s3 + $0xcc] sm:$0xf]
        %v1110 = vld [vmem:[%s3 + $0xd0] sm:$0xf]
        %v1111 = vld [vmem:[%s3 + $0xd4] sm:$0xf]
        %v1112 = vld [vmem:[%s3 + $0xd8] sm:$0xf]
        %v1113 = vld [vmem:[%s3 + $0xdc] sm:$0xf]
        %v1114 = vld [vmem:[%s3 + $0xe0] sm:$0xf]
        %v1115 = vld [vmem:[%s3 + $0xe4] sm:$0xf]
        %v1116 = vld [vmem:[%s3 + $0xe8] sm:$0xf]
        %v1117 = vld [vmem:[%s3 + $0xec] sm:$0xf]
        %v1118 = vld [vmem:[%s3 + $0xf0] sm:$0xf]
        %v1119 = vld [vmem:[%s3 + $0xf4] sm:$0xf]
        %v1120 = vld [vmem:[%s3 + $0xf8] sm:$0xf]
        %v1121 = vld [vmem:[%s3 + $0xfc] sm:$0xf]
        %v1122 = vld [vmem:[%s4] sm:$0x1]
        %v1187 = vunpack.c.l.b16 %v1058
        %v1188 = vunpack.c.l.b16 %v1059
        %v1189 = vunpack.c.l.b16 %v1060
        %v1190 = vunpack.c.l.b16 %v1061
        %v1191 = vunpack.c.l.b16 %v1062
        %v1192 = vunpack.c.l.b16 %v1063
        %v1193 = vunpack.c.l.b16 %v1064
        %v1194 = vunpack.c.l.b16 %v1065
        %v1195 = vunpack.c.l.b16 %v1066
        %v1196 = vunpack.c.l.b16 %v1067
        %v1197 = vunpack.c.l.b16 %v1068
        %v1198 = vunpack.c.l.b16 %v1069
        %v1199 = vunpack.c.l.b16 %v1070
        %v1200 = vunpack.c.l.b16 %v1071
        %v1201 = vunpack.c.l.b16 %v1072
        %v1202 = vunpack.c.l.b16 %v1073
        %v1203 = vunpack.c.l.b16 %v1074
        %v1204 = vunpack.c.l.b16 %v1075
        %v1205 = vunpack.c.l.b16 %v1076
        %v1206 = vunpack.c.l.b16 %v1077
        %v1207 = vunpack.c.l.b16 %v1078
        %v1208 = vunpack.c.l.b16 %v1079
        %v1209 = vunpack.c.l.b16 %v1080
        %v1210 = vunpack.c.l.b16 %v1081
        %v1211 = vunpack.c.l.b16 %v1082
        %v1212 = vunpack.c.l.b16 %v1083
        %v1213 = vunpack.c.l.b16 %v1084
        %v1214 = vunpack.c.l.b16 %v1085
        %v1215 = vunpack.c.l.b16 %v1086
        %v1216 = vunpack.c.l.b16 %v1087
        %v1217 = vunpack.c.l.b16 %v1088
        %v1218 = vunpack.c.l.b16 %v1089
        %v1219 = vunpack.c.l.b16 %v1090
        %v1220 = vunpack.c.l.b16 %v1091
        %v1221 = vunpack.c.l.b16 %v1092
        %v1222 = vunpack.c.l.b16 %v1093
        %v1223 = vunpack.c.l.b16 %v1094
        %v1224 = vunpack.c.l.b16 %v1095
        %v1225 = vunpack.c.l.b16 %v1096
        %v1226 = vunpack.c.l.b16 %v1097
        %v1227 = vunpack.c.l.b16 %v1098
        %v1228 = vunpack.c.l.b16 %v1099
        %v1229 = vunpack.c.l.b16 %v1100
        %v1230 = vunpack.c.l.b16 %v1101
        %v1231 = vunpack.c.l.b16 %v1102
        %v1232 = vunpack.c.l.b16 %v1103
        %v1233 = vunpack.c.l.b16 %v1104
        %v1234 = vunpack.c.l.b16 %v1105
        %v1235 = vunpack.c.l.b16 %v1106
        %v1236 = vunpack.c.l.b16 %v1107
        %v1237 = vunpack.c.l.b16 %v1108
        %v1238 = vunpack.c.l.b16 %v1109
        %v1239 = vunpack.c.l.b16 %v1110
        %v1240 = vunpack.c.l.b16 %v1111
        %v1241 = vunpack.c.l.b16 %v1112
        %v1242 = vunpack.c.l.b16 %v1113
        %v1243 = vunpack.c.l.b16 %v1114
        %v1244 = vunpack.c.l.b16 %v1115
        %v1245 = vunpack.c.l.b16 %v1116
        %v1246 = vunpack.c.l.b16 %v1117
        %v1247 = vunpack.c.l.b16 %v1118
        %v1248 = vunpack.c.l.b16 %v1119
        %v1249 = vunpack.c.l.b16 %v1120
        %v1250 = vunpack.c.l.b16 %v1121
        %v1251 = vpack.c.b16 %v1188, %v1187
        %v1252 = vpack.c.b16 %v1190, %v1189
        %v1253 = vpack.c.b16 %v1192, %v1191
        %v1254 = vpack.c.b16 %v1194, %v1193
        %v1255 = vpack.c.b16 %v1196, %v1195
        %v1256 = vpack.c.b16 %v1198, %v1197
        %v1257 = vpack.c.b16 %v1200, %v1199
        %v1258 = vpack.c.b16 %v1202, %v1201
        %v1259 = vpack.c.b16 %v1204, %v1203
        %v1260 = vpack.c.b16 %v1206, %v1205
        %v1261 = vpack.c.b16 %v1208, %v1207
        %v1262 = vpack.c.b16 %v1210, %v1209
        %v1263 = vpack.c.b16 %v1212, %v1211
        %v1264 = vpack.c.b16 %v1214, %v1213
        %v1265 = vpack.c.b16 %v1216, %v1215
        %v1266 = vpack.c.b16 %v1218, %v1217
        %v1267 = vpack.c.b16 %v1220, %v1219
        %v1268 = vpack.c.b16 %v1222, %v1221
        %v1269 = vpack.c.b16 %v1224, %v1223
        %v1270 = vpack.c.b16 %v1226, %v1225
        %v1271 = vpack.c.b16 %v1228, %v1227
        %v1272 = vpack.c.b16 %v1230, %v1229
        %v1273 = vpack.c.b16 %v1232, %v1231
        %v1274 = vpack.c.b16 %v1234, %v1233
        %v1275 = vpack.c.b16 %v1236, %v1235
        %v1276 = vpack.c.b16 %v1238, %v1237
        %v1277 = vpack.c.b16 %v1240, %v1239
        %v1278 = vpack.c.b16 %v1242, %v1241
        %v1279 = vpack.c.b16 %v1244, %v1243
        %v1280 = vpack.c.b16 %v1246, %v1245
        %v1281 = vpack.c.b16 %v1248, %v1247
        %v1282 = vpack.c.b16 %v1250, %v1249
        %1315 = vmatprep.subr.bf16.mxu0 0
        %1316 = vmatpush1.bf16.msra.mxu0 %v1251
        %1317 = vmatprep.subr.bf16.mxu0 0
        %1318 = vmatpush1.bf16.msra.mxu0 %v1252
        %1319 = vmatprep.subr.bf16.mxu0 0
        %1320 = vmatpush1.bf16.msra.mxu0 %v1253
        %1321 = vmatprep.subr.bf16.mxu0 0
        %1322 = vmatpush1.bf16.msra.mxu0 %v1254
        %1323 = vmatprep.subr.bf16.mxu0 0
        %1324 = vmatpush1.bf16.msra.mxu0 %v1255
        %1325 = vmatprep.subr.bf16.mxu0 0
        %1326 = vmatpush1.bf16.msra.mxu0 %v1256
        %1327 = vmatprep.subr.bf16.mxu0 0
        %1328 = vmatpush1.bf16.msra.mxu0 %v1257
        %1329 = vmatprep.subr.bf16.mxu0 0
        %1330 = vmatpush1.bf16.msra.mxu0 %v1258
        %1331 = vmatprep.subr.bf16.mxu0 0
        %1332 = vmatpush1.bf16.msra.mxu0 %v1259
        %1333 = vmatprep.subr.bf16.mxu0 0
        %1334 = vmatpush1.bf16.msra.mxu0 %v1260
        %1335 = vmatprep.subr.bf16.mxu0 0
        %1336 = vmatpush1.bf16.msra.mxu0 %v1261
        %1337 = vmatprep.subr.bf16.mxu0 0
        %1338 = vmatpush1.bf16.msra.mxu0 %v1262
        %1339 = vmatprep.subr.bf16.mxu0 0
        %1340 = vmatpush1.bf16.msra.mxu0 %v1263
        %1341 = vmatprep.subr.bf16.mxu0 0
        %1342 = vmatpush1.bf16.msra.mxu0 %v1264
        %1343 = vmatprep.subr.bf16.mxu0 0
        %1344 = vmatpush1.bf16.msra.mxu0 %v1265
        %1345 = vmatprep.subr.bf16.mxu0 0
        %1346 = vmatpush1.bf16.msra.mxu0 %v1266
        %1347 = vmatprep.mubr.bf16.mxu0 %v1055
        %1348 = vmatmul.mubr.bf16.gmra.mrb[0].mxu0 %v1054
        %v1349 = vpop.f32.mrb[0].mxu0
        %v1350 = vadd.f32 %v1122, %v1349
        %v1351 = vpop.f32.mrb[0].mxu0
        %v1352 = vpop.f32.mrb[0].mxu0
        %v1353 = vpop.f32.mrb[0].mxu0
        %1354 = vdwg.mxu0
        %1355 = vmatprep.subr.bf16.mxu0 0
        %1356 = vmatpush1.bf16.msra.mxu0 %v1267
        %1357 = vmatprep.subr.bf16.mxu0 0
        %1358 = vmatpush1.bf16.msra.mxu0 %v1268
        %1359 = vmatprep.subr.bf16.mxu0 0
        %1360 = vmatpush1.bf16.msra.mxu0 %v1269
        %1361 = vmatprep.subr.bf16.mxu0 0
        %1362 = vmatpush1.bf16.msra.mxu0 %v1270
        %1363 = vmatprep.subr.bf16.mxu0 0
        %1364 = vmatpush1.bf16.msra.mxu0 %v1271
        %1365 = vmatprep.subr.bf16.mxu0 0
        %1366 = vmatpush1.bf16.msra.mxu0 %v1272
        %1367 = vmatprep.subr.bf16.mxu0 0
        %1368 = vmatpush1.bf16.msra.mxu0 %v1273
        %1369 = vmatprep.subr.bf16.mxu0 0
        %1370 = vmatpush1.bf16.msra.mxu0 %v1274
        %1371 = vmatprep.subr.bf16.mxu0 0
        %1372 = vmatpush1.bf16.msra.mxu0 %v1275
        %1373 = vmatprep.subr.bf16.mxu0 0
        %1374 = vmatpush1.bf16.msra.mxu0 %v1276
        %1375 = vmatprep.subr.bf16.mxu0 0
        %1376 = vmatpush1.bf16.msra.mxu0 %v1277
        %1377 = vmatprep.subr.bf16.mxu0 0
        %1378 = vmatpush1.bf16.msra.mxu0 %v1278
        %1379 = vmatprep.subr.bf16.mxu0 0
        %1380 = vmatpush1.bf16.msra.mxu0 %v1279
        %1381 = vmatprep.subr.bf16.mxu0 0
        %1382 = vmatpush1.bf16.msra.mxu0 %v1280
        %1383 = vmatprep.subr.bf16.mxu0 0
        %1384 = vmatpush1.bf16.msra.mxu0 %v1281
        %1385 = vmatprep.subr.bf16.mxu0 0
        %1386 = vmatpush1.bf16.msra.mxu0 %v1282
        %1387 = vmatprep.mubr.bf16.mxu0 %v1057
        %1388 = vmatmul.mubr.bf16.gmra.mrb[0].mxu0 %v1056
        %v1389 = vpop.f32.mrb[0].mxu0
        %v1390 = vadd.f32 %v1350, %v1389
        %v1391 = vpop.f32.mrb[0].mxu0
        %v1392 = vpop.f32.mrb[0].mxu0
        %v1393 = vpop.f32.mrb[0].mxu0
        %1394 = vdwg.mxu0
        %1395 = vst [vmem:[%s219] sm:$0x1] %v1390
        %s1396 = sand.u32 %s137, 1
        %s1397 = scalar_lea.sflag [#allocation3], %s1396
        %s1398 = sand.u32 %s137, 1
        %s1399 = scalar_lea.vmem [#allocation2], %s1398
        // Predicated region
        $region41: #{_backbone_forward.1} parent=39 // pred_check
          %p1400 = pneg %p147
        $region42: #{_backbone_forward.1} parent=39 // pred_check_branch
          %1402 = sbr.rel (%p1400) target = $region44
        $region43: #{_backbone_forward.1} parent=39 // pred_region
          %s1404 = ssub.s32 16, 16
          %1405 = vsyncadd %s1397, %s1404
          %s1406 = smul.addr %s19, 16
          %s1407 = scalar_lea.hbm %s5, %s1406
          %s1409 = sshll.u32 %s1399, 4
          %s1410 = int_to_ptr.vmem [resolvable:$true] %s1409
          %1412 = dma.vmem_to_hbm [thread:$0]  %s1410, 16, %s1407, %s1397
        $region44: #{_backbone_forward.1} parent=39 // pred_fallthru
          _
      $region40: #{_backbone_forward.1} parent=5 // pred_fallthru
        _
      %p1413 = scmp.le.s32.totalorder 2, %s14
      // Predicated region
      $region45: #{_backbone_forward.1} parent=5 // pred_check
        %p1414 = pneg %p1413
      $region46: #{_backbone_forward.1} parent=5 // pred_check_branch
        %1416 = sbr.rel (%p1414) target = $region48
      $region47: #{_backbone_forward.1} parent=5 // pred_region
        %s1417 = ssub.s32 %s14, 2
        // Predicated region
        $region49: #{_backbone_forward.1} parent=47 // pred_check
          %p1418 = pneg %p153
        $region50: #{_backbone_forward.1} parent=47 // pred_check_branch
          %1420 = sbr.rel (%p1418) target = $region52
        $region51: #{_backbone_forward.1} parent=47 // pred_region
          %s1421 = sand.u32 %s138, 1
          %s1422 = scalar_lea.sflag [#allocation3], %s1421
          %s1423 = sand.u32 %s138, 1
          %s1424 = scalar_lea.vmem [#allocation2], %s1423
          %1425 = dma.done %s1422, 16
        $region52: #{_backbone_forward.1} parent=47 // pred_fallthru
          _
      $region48: #{_backbone_forward.1} parent=5 // pred_fallthru
        _
    $region6: #{_backbone_forward.1} parent=1 // loop_footer
      %s18 = sadd.s32 1, %s14
    $region7: #{_backbone_forward.1} parent=1 // loop_footer_branch
      %13 = sbr.rel target = $region3
    $region8: #{_backbone_forward.1} parent=1 // loop_exit
      _
    %1426 = vsyncpa [#allocation3], 1
    %s1427 = scalar_lea.sflag [#allocation3], 1
    %1428 = vsyncpa %s1427, 1

</llo_original>
